<compile_context>
chip_gen: v7x
topology: tpu7x:2x2x1
jax: 0.10.0
libtpu: 0.0.40
codegen_flags: <defaults>
</compile_context>

<pallas_src>
import functools

import jax
import jax.numpy as jnp
import numpy as np
from jax.experimental import pallas as pl
from jax.experimental.pallas import tpu as pltpu

ACTION_DIM = 3
STATE_DIM = 5 * 6          # 30
H1, H2, H3 = 256, 256, 128
OUT_PAD = 128              # lane-dense padded width of the softmax layer (in-register)
OUT_STORE = 8              # columns actually written back to HBM (>= ACTION_DIM)
BN_EPS = 1e-5
NEG_INF = -1e30            # padded-lane logits -> exp() underflows to exactly 0


def _policy_kernel(x_ref, w1_ref, b1_ref, s1_ref, t1_ref,
                   w2_ref, b2_ref, s2_ref, t2_ref,
                   w3_ref, b3_ref, w4_ref, b4_ref, out_ref, *, use_bn):
    # fc1: Linear(30, 256) + ReLU   (Dropout(0.2) -> identity at inference)
    x = x_ref[...].astype(jnp.bfloat16)          # no-op if x already arrives bf16
    h1 = jnp.dot(x, w1_ref[...], preferred_element_type=jnp.float32) + b1_ref[...]
    h1 = jnp.maximum(h1, 0.0)
    if use_bn:                                   # bn1 folded (B > 1 branch only)
        h1 = h1 * s1_ref[...] + t1_ref[...]
    residual = h1                                # residual tapped AFTER bn1 (as in PyTorch)

    # fc2: Linear(256, 256) + ReLU (+ bn2) + residual
    h2 = jnp.dot(h1.astype(jnp.bfloat16), w2_ref[...],
                 preferred_element_type=jnp.float32) + b2_ref[...]
    h2 = jnp.maximum(h2, 0.0)
    if use_bn:
        h2 = h2 * s2_ref[...] + t2_ref[...]
    h2 = h2 + residual

    # fc3: Linear(256, 128) + ReLU
    h3 = jnp.dot(h2.astype(jnp.bfloat16), w3_ref[...],
                 preferred_element_type=jnp.float32) + b3_ref[...]
    h3 = jnp.maximum(h3, 0.0)

    # output_layer: Linear(128, 3) padded to 128 lanes + Softmax(dim=-1).
    logits = jnp.dot(h3.astype(jnp.bfloat16), w4_ref[...],
                     preferred_element_type=jnp.float32) + b4_ref[...]
    m = jnp.max(logits, axis=-1, keepdims=True)
    e = jnp.exp(logits - m)                      # padded lanes -> exactly 0
    inv = pl.reciprocal(jnp.sum(e, axis=-1, keepdims=True), approx=False)
    probs = e * inv
    # Store only a narrow slice (OUT_STORE cols) -> 16x less HBM writeback.
    out_ref[...] = probs[:, :OUT_STORE].astype(out_ref.dtype)


def prepare_params(params):
    """One-time host-side prep (do NOT redo per call): bf16 matmul weights,
    folded eval-mode BN scale/shift, lane-dense padded output layer."""
    s1 = params["bn1_gamma"] / jnp.sqrt(params["bn1_var"] + BN_EPS)
    t1 = params["bn1_beta"] - params["bn1_mean"] * s1
    s2 = params["bn2_gamma"] / jnp.sqrt(params["bn2_var"] + BN_EPS)
    t2 = params["bn2_beta"] - params["bn2_mean"] * s2

    w4 = jnp.zeros((H3, OUT_PAD), jnp.float32).at[:, :ACTION_DIM].set(params["w4"])
    b4 = jnp.full((OUT_PAD,), NEG_INF, jnp.float32).at[:ACTION_DIM].set(params["b4"])

    return dict(
        w1=params["w1"].astype(jnp.bfloat16), b1=params["b1"].reshape(1, H1),
        s1=s1.reshape(1, H1), t1=t1.reshape(1, H1),
        w2=params["w2"].astype(jnp.bfloat16), b2=params["b2"].reshape(1, H2),
        s2=s2.reshape(1, H2), t2=t2.reshape(1, H2),
        w3=params["w3"].astype(jnp.bfloat16), b3=params["b3"].reshape(1, H3),
        w4=w4.astype(jnp.bfloat16), b4=b4.reshape(1, OUT_PAD),
    )


def _round_up(x, m):
    return ((x + m - 1) // m) * m


def _batch_tiling(B):
    """tile_b, grid_steps.  >=2 even steps once B > 16 (v7x megacore balance),
    ~1K-row tiles at large B so per-step overhead and weight re-push amortize."""
    if B <= 16:
        return B, 1
    n_steps = max(2, pl.cdiv(B, 1024))
    n_steps += n_steps % 2
    tile_b = _round_up(pl.cdiv(B, n_steps), 8)
    return tile_b, pl.cdiv(B, tile_b)


@jax.jit
def policy_forward(x, prepped):
    """Forward pass; x: (B, STATE_DIM) f32 or bf16 -> (B, ACTION_DIM) probs (f32)."""
    B = x.shape[0]
    use_bn = B > 1                     # mirrors `if x.size(0) > 1` in the PyTorch forward
    tile_b, grid_steps = _batch_tiling(B)

    def const_spec(shape):
        # Constant index_map -> block stays VMEM-resident across grid steps.
        return pl.BlockSpec(shape, lambda i, _s=shape: tuple(0 for _ in _s))

    p = prepped
    args = (x, p["w1"], p["b1"], p["s1"], p["t1"],
            p["w2"], p["b2"], p["s2"], p["t2"],
            p["w3"], p["b3"], p["w4"], p["b4"])
    in_specs = [pl.BlockSpec((tile_b, STATE_DIM), lambda i: (i, 0))]
    in_specs += [const_spec(a.shape) for a in args[1:]]

    # TODO(synk): for the B<=8 serving path the call is still dispatch/weight-DMA
    # bound; cross-pallas_call weight residency / request batching is the lever.
    out = pl.pallas_call(
        functools.partial(_policy_kernel, use_bn=use_bn),
        out_shape=jax.ShapeDtypeStruct((B, OUT_STORE), jnp.float32),
        grid=(grid_steps,),
        in_specs=in_specs,
        out_specs=pl.BlockSpec((tile_b, OUT_STORE), lambda i: (i, 0)),
        compiler_params=pltpu.CompilerParams(
            dimension_semantics=("parallel",),        # megacore shard on v7x
            vmem_limit_bytes=32 * 1024 * 1024,        # fits every generation incl. v7x
        ),
    )(*args)
    return out[:, :ACTION_DIM]                        # fused under jit


def init_params(key):
    """Deterministic parameter init (PyTorch-style uniform bounds); weights
    stored (in, out), i.e. transposed vs. PyTorch's (out, in)."""
    def linear(key, fan_in, fan_out):
        kw, kb = jax.random.split(key)
        bound = 1.0 / np.sqrt(fan_in)
        w = jax.random.uniform(kw, (fan_in, fan_out), jnp.float32, -bound, bound)
        b = jax.random.uniform(kb, (fan_out,), jnp.float32, -bound, bound)
        return w, b

    k1, k2, k3, k4 = jax.random.split(key, 4)
    w1, b1 = linear(k1, STATE_DIM, H1)
    w2, b2 = linear(k2, H1, H2)
    w3, b3 = linear(k3, H2, H3)
    w4, b4 = linear(k4, H3, ACTION_DIM)

    return dict(
        w1=w1, b1=b1, w2=w2, b2=b2, w3=w3, b3=b3, w4=w4, b4=b4,
        # BatchNorm1d defaults: gamma=1, beta=0, running_mean=0, running_var=1.
        bn1_gamma=jnp.ones((H1,), jnp.float32), bn1_beta=jnp.zeros((H1,), jnp.float32),
        bn1_mean=jnp.zeros((H1,), jnp.float32), bn1_var=jnp.ones((H1,), jnp.float32),
        bn2_gamma=jnp.ones((H2,), jnp.float32), bn2_beta=jnp.zeros((H2,), jnp.float32),
        bn2_mean=jnp.zeros((H2,), jnp.float32), bn2_var=jnp.ones((H2,), jnp.float32),
    )


def reference_forward(x, params):
    """Pure-JAX f32 reference matching the PyTorch eval-mode forward."""
    B = x.shape[0]
    h1 = jnp.maximum(x @ params["w1"] + params["b1"], 0.0)
    if B > 1:
        s1 = params["bn1_gamma"] / jnp.sqrt(params["bn1_var"] + BN_EPS)
        h1 = (h1 - params["bn1_mean"]) * s1 + params["bn1_beta"]
    res = h1
    h2 = jnp.maximum(h1 @ params["w2"] + params["b2"], 0.0)
    if B > 1:
        s2 = params["bn2_gamma"] / jnp.sqrt(params["bn2_var"] + BN_EPS)
        h2 = (h2 - params["bn2_mean"]) * s2 + params["bn2_beta"]
    h2 = h2 + res
    h3 = jnp.maximum(h2 @ params["w3"] + params["b3"], 0.0)
    logits = h3 @ params["w4"] + params["b4"]
    return jax.nn.softmax(logits, axis=-1)


if __name__ == "__main__":
    key = jax.random.PRNGKey(0)
    k_params, k_x = jax.random.split(key)
    params = init_params(k_params)
    prepped = prepare_params(params)     # one-time host-side fold/cast

    # B=2: BN branch; B=1: no-BN branch; B=40: 2-step parallel grid w/ ragged last block.
    for B in (2, 1, 40):
        kx = jax.random.fold_in(k_x, B)
        x = jax.random.normal(kx, (B, STATE_DIM), jnp.float32)
        # Feed x as bf16 (MXU-native "upstream" cast); the kernel accepts f32 too.
        probs = jax.block_until_ready(policy_forward(x.astype(jnp.bfloat16), prepped))
        ref = reference_forward(x, params)

        assert probs.shape == (B, ACTION_DIM)
        # bf16 matmul operands / bf16 input -> relaxed tolerances.
        np.testing.assert_allclose(np.asarray(probs), np.asarray(ref),
                                   rtol=5e-2, atol=1e-2)
        np.testing.assert_allclose(np.asarray(probs).sum(axis=-1), np.ones(B),
                                   atol=5e-3)

    print("KERNEL_OK")
</pallas_src>

<mosaic_0001>
module attributes {stable_mosaic.version = 11 : i64} {
  func.func @_policy_kernel(%arg0: i32, %arg1: memref<2x30xbf16, #tpu.memory_space<vmem>>, %arg2: memref<30x256xbf16, #tpu.memory_space<vmem>>, %arg3: memref<1x256xf32, #tpu.memory_space<vmem>>, %arg4: memref<1x256xf32, #tpu.memory_space<vmem>>, %arg5: memref<1x256xf32, #tpu.memory_space<vmem>>, %arg6: memref<256x256xbf16, #tpu.memory_space<vmem>>, %arg7: memref<1x256xf32, #tpu.memory_space<vmem>>, %arg8: memref<1x256xf32, #tpu.memory_space<vmem>>, %arg9: memref<1x256xf32, #tpu.memory_space<vmem>>, %arg10: memref<256x128xbf16, #tpu.memory_space<vmem>>, %arg11: memref<1x128xf32, #tpu.memory_space<vmem>>, %arg12: memref<128x128xbf16, #tpu.memory_space<vmem>>, %arg13: memref<1x128xf32, #tpu.memory_space<vmem>>, %arg14: memref<2x8xf32, #tpu.memory_space<vmem>>) attributes {dimension_semantics = [#tpu.dimension_semantics<parallel>], iteration_bounds = array<i64: 1>, scalar_prefetch = 0 : i64, scratch_operands = 0 : i64, tpu.core_type = #tpu.core_type<tc>, window_params = [{transform_indices = @transform_0, window_bounds = array<i64: 2, 30>}, {pipeline_mode = #tpu.pipeline_mode<synchronous>, transform_indices = @transform_1, window_bounds = array<i64: 30, 256>}, {pipeline_mode = #tpu.pipeline_mode<synchronous>, transform_indices = @transform_2, window_bounds = array<i64: 1, 256>}, {pipeline_mode = #tpu.pipeline_mode<synchronous>, transform_indices = @transform_3, window_bounds = array<i64: 1, 256>}, {pipeline_mode = #tpu.pipeline_mode<synchronous>, transform_indices = @transform_4, window_bounds = array<i64: 1, 256>}, {pipeline_mode = #tpu.pipeline_mode<synchronous>, transform_indices = @transform_5, window_bounds = array<i64: 256, 256>}, {pipeline_mode = #tpu.pipeline_mode<synchronous>, transform_indices = @transform_6, window_bounds = array<i64: 1, 256>}, {pipeline_mode = #tpu.pipeline_mode<synchronous>, transform_indices = @transform_7, window_bounds = array<i64: 1, 256>}, {pipeline_mode = #tpu.pipeline_mode<synchronous>, transform_indices = @transform_8, window_bounds = array<i64: 1, 256>}, {pipeline_mode = #tpu.pipeline_mode<synchronous>, transform_indices = @transform_9, window_bounds = array<i64: 256, 128>}, {pipeline_mode = #tpu.pipeline_mode<synchronous>, transform_indices = @transform_10, window_bounds = array<i64: 1, 128>}, {pipeline_mode = #tpu.pipeline_mode<synchronous>, transform_indices = @transform_11, window_bounds = array<i64: 128, 128>}, {pipeline_mode = #tpu.pipeline_mode<synchronous>, transform_indices = @transform_12, window_bounds = array<i64: 1, 128>}, {transform_indices = @transform_13, window_bounds = array<i64: 2, 8>}]} {
    %c0 = arith.constant 0 : index
    %c0_0 = arith.constant 0 : index
    %0 = vector.load %arg1[%c0, %c0_0] : memref<2x30xbf16, #tpu.memory_space<vmem>>, vector<2x30xbf16>
    %c0_1 = arith.constant 0 : index
    %c0_2 = arith.constant 0 : index
    %1 = vector.load %arg2[%c0_1, %c0_2] : memref<30x256xbf16, #tpu.memory_space<vmem>>, vector<30x256xbf16>
    %cst = arith.constant dense<0.000000e+00> : vector<2x256xf32>
    %2 = tpu.matmul %0, %1, %cst {dimension_numbers = #tpu.dot_dimension_numbers<[1], [0], [0], [1], [0, 0, 1, 1], [], []>} : vector<2x30xbf16>, vector<30x256xbf16>, vector<2x256xf32> -> vector<2x256xf32>
    %c0_3 = arith.constant 0 : index
    %c0_4 = arith.constant 0 : index
    %3 = vector.load %arg3[%c0_3, %c0_4] : memref<1x256xf32, #tpu.memory_space<vmem>>, vector<1x256xf32>
    %4 = vector.broadcast %3 : vector<1x256xf32> to vector<2x256xf32>
    %5 = arith.addf %2, %4 : vector<2x256xf32>
    %cst_5 = arith.constant 0.000000e+00 : f32
    %6 = vector.broadcast %cst_5 : f32 to vector<2x256xf32>
    %7 = arith.maximumf %5, %6 : vector<2x256xf32>
    %c0_6 = arith.constant 0 : index
    %c0_7 = arith.constant 0 : index
    %8 = vector.load %arg4[%c0_6, %c0_7] : memref<1x256xf32, #tpu.memory_space<vmem>>, vector<1x256xf32>
    %9 = vector.broadcast %8 : vector<1x256xf32> to vector<2x256xf32>
    %10 = arith.mulf %7, %9 : vector<2x256xf32>
    %c0_8 = arith.constant 0 : index
    %c0_9 = arith.constant 0 : index
    %11 = vector.load %arg5[%c0_8, %c0_9] : memref<1x256xf32, #tpu.memory_space<vmem>>, vector<1x256xf32>
    %12 = vector.broadcast %11 : vector<1x256xf32> to vector<2x256xf32>
    %13 = arith.addf %10, %12 : vector<2x256xf32>
    %14 = arith.truncf %13 : vector<2x256xf32> to vector<2x256xbf16>
    %c0_10 = arith.constant 0 : index
    %c0_11 = arith.constant 0 : index
    %15 = vector.load %arg6[%c0_10, %c0_11] : memref<256x256xbf16, #tpu.memory_space<vmem>>, vector<256x256xbf16>
    %cst_12 = arith.constant dense<0.000000e+00> : vector<2x256xf32>
    %16 = tpu.matmul %14, %15, %cst_12 {dimension_numbers = #tpu.dot_dimension_numbers<[1], [0], [0], [1], [0, 0, 1, 1], [], []>} : vector<2x256xbf16>, vector<256x256xbf16>, vector<2x256xf32> -> vector<2x256xf32>
    %c0_13 = arith.constant 0 : index
    %c0_14 = arith.constant 0 : index
    %17 = vector.load %arg7[%c0_13, %c0_14] : memref<1x256xf32, #tpu.memory_space<vmem>>, vector<1x256xf32>
    %18 = vector.broadcast %17 : vector<1x256xf32> to vector<2x256xf32>
    %19 = arith.addf %16, %18 : vector<2x256xf32>
    %cst_15 = arith.constant 0.000000e+00 : f32
    %20 = vector.broadcast %cst_15 : f32 to vector<2x256xf32>
    %21 = arith.maximumf %19, %20 : vector<2x256xf32>
    %c0_16 = arith.constant 0 : index
    %c0_17 = arith.constant 0 : index
    %22 = vector.load %arg8[%c0_16, %c0_17] : memref<1x256xf32, #tpu.memory_space<vmem>>, vector<1x256xf32>
    %23 = vector.broadcast %22 : vector<1x256xf32> to vector<2x256xf32>
    %24 = arith.mulf %21, %23 : vector<2x256xf32>
    %c0_18 = arith.constant 0 : index
    %c0_19 = arith.constant 0 : index
    %25 = vector.load %arg9[%c0_18, %c0_19] : memref<1x256xf32, #tpu.memory_space<vmem>>, vector<1x256xf32>
    %26 = vector.broadcast %25 : vector<1x256xf32> to vector<2x256xf32>
    %27 = arith.addf %24, %26 : vector<2x256xf32>
    %28 = arith.addf %27, %13 : vector<2x256xf32>
    %29 = arith.truncf %28 : vector<2x256xf32> to vector<2x256xbf16>
    %c0_20 = arith.constant 0 : index
    %c0_21 = arith.constant 0 : index
    %30 = vector.load %arg10[%c0_20, %c0_21] : memref<256x128xbf16, #tpu.memory_space<vmem>>, vector<256x128xbf16>
    %cst_22 = arith.constant dense<0.000000e+00> : vector<2x128xf32>
    %31 = tpu.matmul %29, %30, %cst_22 {dimension_numbers = #tpu.dot_dimension_numbers<[1], [0], [0], [1], [0, 0, 1, 1], [], []>} : vector<2x256xbf16>, vector<256x128xbf16>, vector<2x128xf32> -> vector<2x128xf32>
    %c0_23 = arith.constant 0 : index
    %c0_24 = arith.constant 0 : index
    %32 = vector.load %arg11[%c0_23, %c0_24] : memref<1x128xf32, #tpu.memory_space<vmem>>, vector<1x128xf32>
    %33 = vector.broadcast %32 : vector<1x128xf32> to vector<2x128xf32>
    %34 = arith.addf %31, %33 : vector<2x128xf32>
    %cst_25 = arith.constant 0.000000e+00 : f32
    %35 = vector.broadcast %cst_25 : f32 to vector<2x128xf32>
    %36 = arith.maximumf %34, %35 : vector<2x128xf32>
    %37 = arith.truncf %36 : vector<2x128xf32> to vector<2x128xbf16>
    %c0_26 = arith.constant 0 : index
    %c0_27 = arith.constant 0 : index
    %38 = vector.load %arg12[%c0_26, %c0_27] : memref<128x128xbf16, #tpu.memory_space<vmem>>, vector<128x128xbf16>
    %cst_28 = arith.constant dense<0.000000e+00> : vector<2x128xf32>
    %39 = tpu.matmul %37, %38, %cst_28 {dimension_numbers = #tpu.dot_dimension_numbers<[1], [0], [0], [1], [0, 0, 1, 1], [], []>} : vector<2x128xbf16>, vector<128x128xbf16>, vector<2x128xf32> -> vector<2x128xf32>
    %c0_29 = arith.constant 0 : index
    %c0_30 = arith.constant 0 : index
    %40 = vector.load %arg13[%c0_29, %c0_30] : memref<1x128xf32, #tpu.memory_space<vmem>>, vector<1x128xf32>
    %41 = vector.broadcast %40 : vector<1x128xf32> to vector<2x128xf32>
    %42 = arith.addf %39, %41 : vector<2x128xf32>
    %cst_31 = arith.constant dense<0xFF800000> : vector<2xf32>
    %43 = vector.multi_reduction <maximumf>, %42, %cst_31 [1] : vector<2x128xf32> to vector<2xf32>
    %44 = vector.shape_cast %43 : vector<2xf32> to vector<2x1xf32>
    %45 = vector.broadcast %44 : vector<2x1xf32> to vector<2x128xf32>
    %46 = arith.subf %42, %45 : vector<2x128xf32>
    %47 = math.exp %46 : vector<2x128xf32>
    %cst_32 = arith.constant dense<0.000000e+00> : vector<2xf32>
    %48 = vector.multi_reduction <add>, %47, %cst_32 [1] : vector<2x128xf32> to vector<2xf32>
    %49 = vector.shape_cast %48 : vector<2xf32> to vector<2x1xf32>
    %50 = tpu.reciprocal %49 : vector<2x1xf32> -> vector<2x1xf32>
    %51 = vector.broadcast %50 : vector<2x1xf32> to vector<2x128xf32>
    %52 = arith.mulf %47, %51 : vector<2x128xf32>
    %53 = vector.extract_strided_slice %52 {offsets = [0, 0], sizes = [2, 8], strides = [1, 1]} : vector<2x128xf32> to vector<2x8xf32>
    %c0_33 = arith.constant 0 : index
    %c0_34 = arith.constant 0 : index
    %54 = vector.load %arg14[%c0_33, %c0_34] : memref<2x8xf32, #tpu.memory_space<vmem>>, vector<2x8xf32>
    tpu.vector_store %arg14[%c0_33, %c0_34], %53 {strides = array<i32>} : memref<2x8xf32, #tpu.memory_space<vmem>>, vector<2x8xf32>,
    return
  }
  func.func @transform_0(%arg0: i32) -> (i32, i32) {
    %c0_i32 = arith.constant 0 : i32
    %c0_i32_0 = arith.constant 0 : i32
    return %arg0, %c0_i32 : i32, i32
  }
  func.func @transform_1(%arg0: i32) -> (i32, i32) {
    %c0_i32 = arith.constant 0 : i32
    %c0_i32_0 = arith.constant 0 : i32
    %c0_i32_1 = arith.constant 0 : i32
    return %c0_i32, %c0_i32_0 : i32, i32
  }
  func.func @transform_2(%arg0: i32) -> (i32, i32) {
    %c0_i32 = arith.constant 0 : i32
    %c0_i32_0 = arith.constant 0 : i32
    %c0_i32_1 = arith.constant 0 : i32
    return %c0_i32, %c0_i32_0 : i32, i32
  }
  func.func @transform_3(%arg0: i32) -> (i32, i32) {
    %c0_i32 = arith.constant 0 : i32
    %c0_i32_0 = arith.constant 0 : i32
    %c0_i32_1 = arith.constant 0 : i32
    return %c0_i32, %c0_i32_0 : i32, i32
  }
  func.func @transform_4(%arg0: i32) -> (i32, i32) {
    %c0_i32 = arith.constant 0 : i32
    %c0_i32_0 = arith.constant 0 : i32
    %c0_i32_1 = arith.constant 0 : i32
    return %c0_i32, %c0_i32_0 : i32, i32
  }
  func.func @transform_5(%arg0: i32) -> (i32, i32) {
    %c0_i32 = arith.constant 0 : i32
    %c0_i32_0 = arith.constant 0 : i32
    %c0_i32_1 = arith.constant 0 : i32
    return %c0_i32, %c0_i32_0 : i32, i32
  }
  func.func @transform_6(%arg0: i32) -> (i32, i32) {
    %c0_i32 = arith.constant 0 : i32
    %c0_i32_0 = arith.constant 0 : i32
    %c0_i32_1 = arith.constant 0 : i32
    return %c0_i32, %c0_i32_0 : i32, i32
  }
  func.func @transform_7(%arg0: i32) -> (i32, i32) {
    %c0_i32 = arith.constant 0 : i32
    %c0_i32_0 = arith.constant 0 : i32
    %c0_i32_1 = arith.constant 0 : i32
    return %c0_i32, %c0_i32_0 : i32, i32
  }
  func.func @transform_8(%arg0: i32) -> (i32, i32) {
    %c0_i32 = arith.constant 0 : i32
    %c0_i32_0 = arith.constant 0 : i32
    %c0_i32_1 = arith.constant 0 : i32
    return %c0_i32, %c0_i32_0 : i32, i32
  }
  func.func @transform_9(%arg0: i32) -> (i32, i32) {
    %c0_i32 = arith.constant 0 : i32
    %c0_i32_0 = arith.constant 0 : i32
    %c0_i32_1 = arith.constant 0 : i32
    return %c0_i32, %c0_i32_0 : i32, i32
  }
  func.func @transform_10(%arg0: i32) -> (i32, i32) {
    %c0_i32 = arith.constant 0 : i32
    %c0_i32_0 = arith.constant 0 : i32
    %c0_i32_1 = arith.constant 0 : i32
    return %c0_i32, %c0_i32_0 : i32, i32
  }
  func.func @transform_11(%arg0: i32) -> (i32, i32) {
    %c0_i32 = arith.constant 0 : i32
    %c0_i32_0 = arith.constant 0 : i32
    %c0_i32_1 = arith.constant 0 : i32
    return %c0_i32, %c0_i32_0 : i32, i32
  }
  func.func @transform_12(%arg0: i32) -> (i32, i32) {
    %c0_i32 = arith.constant 0 : i32
    %c0_i32_0 = arith.constant 0 : i32
    %c0_i32_1 = arith.constant 0 : i32
    return %c0_i32, %c0_i32_0 : i32, i32
  }
  func.func @transform_13(%arg0: i32) -> (i32, i32) {
    %c0_i32 = arith.constant 0 : i32
    %c0_i32_0 = arith.constant 0 : i32
    return %arg0, %c0_i32 : i32, i32
  }
}

</mosaic_0001>

<llo_original>
// kernel: policy_forward.1
$region0: #{policy_forward.1}
  #allocation0 [shape = 'u32[]', space=smem, size = 0x4, offset = 0x4, fixed_abs, tag = 'smem constant byte address 0x4 - core index']
  #allocation1 [shape = 'u32[144,128]{1,0:T(1,128)}', space=vmem, size = 0x12000, scoped, tag = 'internal scratch']
  %s0 = inlined_call_operand.hbm [shape: bf16[2,30], index: 0, kind: input, shape index: {}]
  %s1 = inlined_call_operand.vmem [shape: bf16[30,256], index: 1, kind: input, shape index: {}]
  %s2 = inlined_call_operand.vmem [shape: f32[1,256], index: 2, kind: input, shape index: {}]
  %s3 = inlined_call_operand.hbm [shape: f32[1,256], index: 3, kind: input, shape index: {}]
  %s4 = inlined_call_operand.hbm [shape: f32[1,256], index: 4, kind: input, shape index: {}]
  %s5 = inlined_call_operand.hbm [shape: bf16[256,256], index: 5, kind: input, shape index: {}]
  %s6 = inlined_call_operand.hbm [shape: f32[1,256], index: 6, kind: input, shape index: {}]
  %s7 = inlined_call_operand.hbm [shape: f32[1,256], index: 7, kind: input, shape index: {}]
  %s8 = inlined_call_operand.hbm [shape: f32[1,256], index: 8, kind: input, shape index: {}]
  %s9 = inlined_call_operand.hbm [shape: bf16[256,128], index: 9, kind: input, shape index: {}]
  %s10 = inlined_call_operand.hbm [shape: f32[1,128], index: 10, kind: input, shape index: {}]
  %s11 = inlined_call_operand.hbm [shape: bf16[128,128], index: 11, kind: input, shape index: {}]
  %s12 = inlined_call_operand.hbm [shape: f32[1,128], index: 12, kind: input, shape index: {}]
  %s13 = inlined_call_operand.hbm [shape: f32[2,8], index: 13, kind: output, shape index: {}]
  %s14 = sld [smem:[#allocation0]]
  $region106: #{policy_forward.1} parent=0
    _
  %s16 = ssub.s32 1, %s14
  %s17 = scalar_select 0, %s16, %s14
  $region1: #{policy_forward.1} parent=0
    #allocation2 [shape = 'u8[512]{0}', space=vmem, size = 0x400, scoped, tag = 'input window, operand 0, single buffered']
    #allocation3 [shape = 's32[1]{0}', space=sflag, size = 0x4, scoped, tag = 'scoped memory for policy_forward.1']
    #allocation4 [shape = 's32[1]{0}', space=sflag, size = 0x4, scoped, tag = 'scoped memory for policy_forward.1']
    #allocation5 [shape = 'u8[1024]{0}', space=vmem, size = 0x400, scoped, tag = 'input window, operand 3, single buffered']
    #allocation6 [shape = 's32[1]{0}', space=sflag, size = 0x4, scoped, tag = 'scoped memory for policy_forward.1']
    #allocation7 [shape = 'u8[1024]{0}', space=vmem, size = 0x400, scoped, tag = 'input window, operand 4, single buffered']
    #allocation8 [shape = 'u8[131072]{0}', space=vmem, size = 0x20000, scoped, tag = 'input window, operand 5, single buffered']
    #allocation9 [shape = 's32[1]{0}', space=sflag, size = 0x4, scoped, tag = 'scoped memory for policy_forward.1']
    #allocation10 [shape = 'u8[1024]{0}', space=vmem, size = 0x400, scoped, tag = 'input window, operand 6, single buffered']
    #allocation11 [shape = 'u8[1024]{0}', space=vmem, size = 0x400, scoped, tag = 'input window, operand 7, single buffered']
    #allocation12 [shape = 's32[1]{0}', space=sflag, size = 0x4, scoped, tag = 'scoped memory for policy_forward.1']
    #allocation13 [shape = 'u8[1024]{0}', space=vmem, size = 0x400, scoped, tag = 'input window, operand 8, single buffered']
    #allocation14 [shape = 'u8[65536]{0}', space=vmem, size = 0x10000, scoped, tag = 'input window, operand 9, single buffered']
    #allocation15 [shape = 's32[1]{0}', space=sflag, size = 0x4, scoped, tag = 'scoped memory for policy_forward.1']
    #allocation16 [shape = 'u8[512]{0}', space=vmem, size = 0x400, scoped, tag = 'input window, operand 10, single buffered']
    #allocation17 [shape = 'u8[32768]{0}', space=vmem, size = 0x8000, scoped, tag = 'input window, operand 11, single buffered']
    #allocation18 [shape = 's32[1]{0}', space=sflag, size = 0x4, scoped, tag = 'scoped memory for policy_forward.1']
    #allocation19 [shape = 'u8[512]{0}', space=vmem, size = 0x400, scoped, tag = 'input window, operand 12, single buffered']
    #allocation20 [shape = 'u8[1024]{0}', space=vmem, size = 0x400, scoped, tag = 'output window, operand 0, single buffered']
    %18 = vsyncpa [#allocation3], 0
    %19 = vsyncpa [#allocation6], 0
    %20 = vsyncpa [#allocation9], 0
    %21 = vsyncpa [#allocation12], 0
    %22 = vsyncpa [#allocation15], 0
    %23 = vsyncpa [#allocation18], 0
    %24 = vsyncpa [#allocation4], 0
    // Predicated region
    $region2: #{policy_forward.1} parent=1 // pred_check
      _
    $region3: #{policy_forward.1} parent=1 // pred_check_branch
      %26 = sbr.rel (0) target = $region5
    $region4: #{policy_forward.1} parent=1 // pred_region
      %s28 = ssub.s32 16, 16
      %29 = vsyncadd [#allocation3], %s28
      %s31 = sshll.u32 [#allocation2], 4
      %s32 = int_to_ptr.vmem [resolvable:$true] %s31
      %34 = dma.hbm_to_vmem [thread:$0]  %s0, 16, %s32, [#allocation3]
    $region5: #{policy_forward.1} parent=1 // pred_fallthru
      _
    // Predicated region
    $region6: #{policy_forward.1} parent=1 // pred_check
      _
    $region7: #{policy_forward.1} parent=1 // pred_check_branch
      %36 = sbr.rel (0) target = $region9
    $region8: #{policy_forward.1} parent=1 // pred_region
      _
    $region9: #{policy_forward.1} parent=1 // pred_fallthru
      _
    // Predicated region
    $region10: #{policy_forward.1} parent=1 // pred_check
      _
    $region11: #{policy_forward.1} parent=1 // pred_check_branch
      %38 = sbr.rel (0) target = $region13
    $region12: #{policy_forward.1} parent=1 // pred_region
      _
    $region13: #{policy_forward.1} parent=1 // pred_fallthru
      _
    // Predicated region
    $region14: #{policy_forward.1} parent=1 // pred_check
      _
    $region15: #{policy_forward.1} parent=1 // pred_check_branch
      %40 = sbr.rel (0) target = $region17
    $region16: #{policy_forward.1} parent=1 // pred_region
      %s42 = ssub.s32 32, 32
      %43 = vsyncadd [#allocation6], %s42
      %s45 = sshll.u32 [#allocation5], 4
      %s46 = int_to_ptr.vmem [resolvable:$true] %s45
      %48 = dma.hbm_to_vmem [thread:$0]  %s3, 32, %s46, [#allocation6]
    $region17: #{policy_forward.1} parent=1 // pred_fallthru
      _
    // Predicated region
    $region18: #{policy_forward.1} parent=1 // pred_check
      _
    $region19: #{policy_forward.1} parent=1 // pred_check_branch
      %50 = sbr.rel (0) target = $region21
    $region20: #{policy_forward.1} parent=1 // pred_region
      %s52 = ssub.s32 32, 32
      %53 = vsyncadd [#allocation6], %s52
      %s55 = sshll.u32 [#allocation7], 4
      %s56 = int_to_ptr.vmem [resolvable:$true] %s55
      %58 = dma.hbm_to_vmem [thread:$0]  %s4, 32, %s56, [#allocation6]
    $region21: #{policy_forward.1} parent=1 // pred_fallthru
      _
    // Predicated region
    $region22: #{policy_forward.1} parent=1 // pred_check
      _
    $region23: #{policy_forward.1} parent=1 // pred_check_branch
      %60 = sbr.rel (0) target = $region25
    $region24: #{policy_forward.1} parent=1 // pred_region
      %s62 = ssub.s32 4096, 4096
      %63 = vsyncadd [#allocation9], %s62
      %s64 = sshll.u32 [#allocation8], 4
      %s65 = int_to_ptr.vmem [resolvable:$true] %s64
      %70 = dma.hbm_to_vmem [thread:$0]  %s5, 4096, %s65, [#allocation9], 128, 128, 8
    $region25: #{policy_forward.1} parent=1 // pred_fallthru
      _
    // Predicated region
    $region26: #{policy_forward.1} parent=1 // pred_check
      _
    $region27: #{policy_forward.1} parent=1 // pred_check_branch
      %72 = sbr.rel (0) target = $region29
    $region28: #{policy_forward.1} parent=1 // pred_region
      %s74 = ssub.s32 32, 32
      %75 = vsyncadd [#allocation9], %s74
      %s77 = sshll.u32 [#allocation10], 4
      %s78 = int_to_ptr.vmem [resolvable:$true] %s77
      %80 = dma.hbm_to_vmem [thread:$0]  %s6, 32, %s78, [#allocation9]
    $region29: #{policy_forward.1} parent=1 // pred_fallthru
      _
    // Predicated region
    $region30: #{policy_forward.1} parent=1 // pred_check
      _
    $region31: #{policy_forward.1} parent=1 // pred_check_branch
      %82 = sbr.rel (0) target = $region33
    $region32: #{policy_forward.1} parent=1 // pred_region
      %s84 = ssub.s32 32, 32
      %85 = vsyncadd [#allocation12], %s84
      %s87 = sshll.u32 [#allocation11], 4
      %s88 = int_to_ptr.vmem [resolvable:$true] %s87
      %90 = dma.hbm_to_vmem [thread:$0]  %s7, 32, %s88, [#allocation12]
    $region33: #{policy_forward.1} parent=1 // pred_fallthru
      _
    // Predicated region
    $region34: #{policy_forward.1} parent=1 // pred_check
      _
    $region35: #{policy_forward.1} parent=1 // pred_check_branch
      %92 = sbr.rel (0) target = $region37
    $region36: #{policy_forward.1} parent=1 // pred_region
      %s94 = ssub.s32 32, 32
      %95 = vsyncadd [#allocation12], %s94
      %s97 = sshll.u32 [#allocation13], 4
      %s98 = int_to_ptr.vmem [resolvable:$true] %s97
      %100 = dma.hbm_to_vmem [thread:$0]  %s8, 32, %s98, [#allocation12]
    $region37: #{policy_forward.1} parent=1 // pred_fallthru
      _
    // Predicated region
    $region38: #{policy_forward.1} parent=1 // pred_check
      _
    $region39: #{policy_forward.1} parent=1 // pred_check_branch
      %102 = sbr.rel (0) target = $region41
    $region40: #{policy_forward.1} parent=1 // pred_region
      %s104 = ssub.s32 2048, 2048
      %105 = vsyncadd [#allocation15], %s104
      %s106 = sshll.u32 [#allocation14], 4
      %s107 = int_to_ptr.vmem [resolvable:$true] %s106
      %112 = dma.hbm_to_vmem [thread:$0]  %s9, 2048, %s107, [#allocation15], 64, 64, 4
    $region41: #{policy_forward.1} parent=1 // pred_fallthru
      _
    // Predicated region
    $region42: #{policy_forward.1} parent=1 // pred_check
      _
    $region43: #{policy_forward.1} parent=1 // pred_check_branch
      %114 = sbr.rel (0) target = $region45
    $region44: #{policy_forward.1} parent=1 // pred_region
      %s116 = ssub.s32 16, 16
      %117 = vsyncadd [#allocation15], %s116
      %s119 = sshll.u32 [#allocation16], 4
      %s120 = int_to_ptr.vmem [resolvable:$true] %s119
      %122 = dma.hbm_to_vmem [thread:$0]  %s10, 16, %s120, [#allocation15]
    $region45: #{policy_forward.1} parent=1 // pred_fallthru
      _
    // Predicated region
    $region46: #{policy_forward.1} parent=1 // pred_check
      _
    $region47: #{policy_forward.1} parent=1 // pred_check_branch
      %124 = sbr.rel (0) target = $region49
    $region48: #{policy_forward.1} parent=1 // pred_region
      %s126 = ssub.s32 1024, 1024
      %127 = vsyncadd [#allocation18], %s126
      %s128 = sshll.u32 [#allocation17], 4
      %s129 = int_to_ptr.vmem [resolvable:$true] %s128
      %134 = dma.hbm_to_vmem [thread:$0]  %s11, 1024, %s129, [#allocation18], 64, 64, 4
    $region49: #{policy_forward.1} parent=1 // pred_fallthru
      _
    // Predicated region
    $region50: #{policy_forward.1} parent=1 // pred_check
      _
    $region51: #{policy_forward.1} parent=1 // pred_check_branch
      %136 = sbr.rel (0) target = $region53
    $region52: #{policy_forward.1} parent=1 // pred_region
      %s138 = ssub.s32 16, 16
      %139 = vsyncadd [#allocation18], %s138
      %s141 = sshll.u32 [#allocation19], 4
      %s142 = int_to_ptr.vmem [resolvable:$true] %s141
      %144 = dma.hbm_to_vmem [thread:$0]  %s12, 16, %s142, [#allocation18]
    $region53: #{policy_forward.1} parent=1 // pred_fallthru
      _
    // Predicated region
    $region54: #{policy_forward.1} parent=1 // pred_check
      _
    $region55: #{policy_forward.1} parent=1 // pred_check_branch
      %146 = sbr.rel (0) target = $region57
    $region56: #{policy_forward.1} parent=1 // pred_region
      %147 = dma.done [#allocation3], 16
    $region57: #{policy_forward.1} parent=1 // pred_fallthru
      _
    // Predicated region
    $region58: #{policy_forward.1} parent=1 // pred_check
      _
    $region59: #{policy_forward.1} parent=1 // pred_check_branch
      %149 = sbr.rel (0) target = $region61
    $region60: #{policy_forward.1} parent=1 // pred_region
      %150 = dma.done [#allocation6], 32
    $region61: #{policy_forward.1} parent=1 // pred_fallthru
      _
    // Predicated region
    $region62: #{policy_forward.1} parent=1 // pred_check
      _
    $region63: #{policy_forward.1} parent=1 // pred_check_branch
      %152 = sbr.rel (0) target = $region65
    $region64: #{policy_forward.1} parent=1 // pred_region
      %153 = dma.done [#allocation6], 32
    $region65: #{policy_forward.1} parent=1 // pred_fallthru
      _
    // Predicated region
    $region66: #{policy_forward.1} parent=1 // pred_check
      _
    $region67: #{policy_forward.1} parent=1 // pred_check_branch
      %155 = sbr.rel (0) target = $region69
    $region68: #{policy_forward.1} parent=1 // pred_region
      %156 = dma.done [#allocation9], 4096
    $region69: #{policy_forward.1} parent=1 // pred_fallthru
      _
    // Predicated region
    $region70: #{policy_forward.1} parent=1 // pred_check
      _
    $region71: #{policy_forward.1} parent=1 // pred_check_branch
      %158 = sbr.rel (0) target = $region73
    $region72: #{policy_forward.1} parent=1 // pred_region
      %159 = dma.done [#allocation9], 32
    $region73: #{policy_forward.1} parent=1 // pred_fallthru
      _
    // Predicated region
    $region74: #{policy_forward.1} parent=1 // pred_check
      _
    $region75: #{policy_forward.1} parent=1 // pred_check_branch
      %161 = sbr.rel (0) target = $region77
    $region76: #{policy_forward.1} parent=1 // pred_region
      %162 = dma.done [#allocation12], 32
    $region77: #{policy_forward.1} parent=1 // pred_fallthru
      _
    // Predicated region
    $region78: #{policy_forward.1} parent=1 // pred_check
      _
    $region79: #{policy_forward.1} parent=1 // pred_check_branch
      %164 = sbr.rel (0) target = $region81
    $region80: #{policy_forward.1} parent=1 // pred_region
      %165 = dma.done [#allocation12], 32
    $region81: #{policy_forward.1} parent=1 // pred_fallthru
      _
    // Predicated region
    $region82: #{policy_forward.1} parent=1 // pred_check
      _
    $region83: #{policy_forward.1} parent=1 // pred_check_branch
      %167 = sbr.rel (0) target = $region85
    $region84: #{policy_forward.1} parent=1 // pred_region
      %168 = dma.done [#allocation15], 2048
    $region85: #{policy_forward.1} parent=1 // pred_fallthru
      _
    // Predicated region
    $region86: #{policy_forward.1} parent=1 // pred_check
      _
    $region87: #{policy_forward.1} parent=1 // pred_check_branch
      %170 = sbr.rel (0) target = $region89
    $region88: #{policy_forward.1} parent=1 // pred_region
      %171 = dma.done [#allocation15], 16
    $region89: #{policy_forward.1} parent=1 // pred_fallthru
      _
    // Predicated region
    $region90: #{policy_forward.1} parent=1 // pred_check
      _
    $region91: #{policy_forward.1} parent=1 // pred_check_branch
      %173 = sbr.rel (0) target = $region93
    $region92: #{policy_forward.1} parent=1 // pred_region
      %174 = dma.done [#allocation18], 1024
    $region93: #{policy_forward.1} parent=1 // pred_fallthru
      _
    // Predicated region
    $region94: #{policy_forward.1} parent=1 // pred_check
      _
    $region95: #{policy_forward.1} parent=1 // pred_check_branch
      %176 = sbr.rel (0) target = $region97
    $region96: #{policy_forward.1} parent=1 // pred_region
      %177 = dma.done [#allocation18], 16
    $region97: #{policy_forward.1} parent=1 // pred_fallthru
      _
    %v179 = vld [vmem:[#allocation2] sm:$0x1]
    %v180 = vld [vmem:[%s1] sm:$0xff]
    %v181 = vld [vmem:[%s1 + $0x8] sm:$0xff]
    %v182 = vld [vmem:[%s1 + $0x10] sm:$0xff]
    %v183 = vld [vmem:[%s1 + $0x18] sm:$0x77]
    %v184 = vld [vmem:[%s2] sm:$0x3]
    %v186 = vlaneseq
    %v187 = vshrl.u32 %v186, 7
    %v188 = vsub.s32 0, %v187
    %v189 = vrot.slane %v184, %v188
    %v190 = vlaneseq
    %v191 = vshrl.u32 %v190, 7
    %v192 = vsub.s32 1, %v191
    %v193 = vrot.slane %v184, %v192
    %v200 = vunpack.c.l.b16 %v180
    %v201 = vunpack.c.h.b16 %v180
    %v202 = vunpack.c.l.b16 %v181
    %v203 = vunpack.c.h.b16 %v181
    %v204 = vunpack.c.l.b16 %v182
    %v205 = vunpack.c.h.b16 %v182
    %v206 = vunpack.c.l.b16 %v183
    %v207 = vunpack.c.h.b16 %v183
    %v208 = vpack.c.b16 %v202, %v200
    %v209 = vpack.c.b16 %v203, %v201
    %v210 = vpack.c.b16 %v206, %v204
    %v211 = vpack.c.b16 %v207, %v205
    %vm214 = vcmask 244736
    %v216 = vsel %vm214, %v179, 0
    %vm218 = vcmask 1046528
    %v220 = vsel %vm218, %v210, 0
    %v223 = vsel %vm218, %v211, 0
    %225 = vmatprep.subr.bf16.mxu0 %v209
    %226 = vmatpush1.bf16.msra.mxu0 %v208
    %227 = vmatprep.subr.bf16.mxu0 %v223
    %228 = vmatpush1.bf16.msra.mxu0 %v220
    %229 = vmatprep.subr.bf16.mxu0 0
    %230 = vmatpush1.bf16.msra.mxu0 0
    %231 = vmatprep.subr.bf16.mxu0 0
    %232 = vmatpush1.bf16.msra.mxu0 0
    %233 = vmatprep.subr.bf16.mxu0 0
    %234 = vmatpush1.bf16.msra.mxu0 0
    %235 = vmatprep.subr.bf16.mxu0 0
    %236 = vmatpush1.bf16.msra.mxu0 0
    %237 = vmatprep.subr.bf16.mxu0 0
    %238 = vmatpush1.bf16.msra.mxu0 0
    %239 = vmatprep.subr.bf16.mxu0 0
    %240 = vmatpush1.bf16.msra.mxu0 0
    %241 = vmatprep.subr.bf16.mxu0 0
    %242 = vmatpush1.bf16.msra.mxu0 0
    %243 = vmatprep.subr.bf16.mxu0 0
    %244 = vmatpush1.bf16.msra.mxu0 0
    %245 = vmatprep.subr.bf16.mxu0 0
    %246 = vmatpush1.bf16.msra.mxu0 0
    %247 = vmatprep.subr.bf16.mxu0 0
    %248 = vmatpush1.bf16.msra.mxu0 0
    %249 = vmatprep.subr.bf16.mxu0 0
    %250 = vmatpush1.bf16.msra.mxu0 0
    %251 = vmatprep.subr.bf16.mxu0 0
    %252 = vmatpush1.bf16.msra.mxu0 0
    %253 = vmatprep.subr.bf16.mxu0 0
    %254 = vmatpush1.bf16.msra.mxu0 0
    %255 = vmatprep.subr.bf16.mxu0 0
    %256 = vmatpush1.bf16.msra.mxu0 0
    %257 = vmatprep.mubr.bf16.mxu0 0
    %258 = vmatmul.mubr.bf16.gmra.mrb[0].mxu0 %v216
    %v259 = vpop.f32.mrb[0].mxu0
    %v260 = vadd.f32 %v189, %v259
    %v261 = vpop.f32.mrb[0].mxu0
    %v262 = vadd.f32 %v193, %v261
    %v263 = vpop.f32.mrb[0].mxu0
    %v264 = vpop.f32.mrb[0].mxu0
    %265 = vdwg.mxu0
    %v266 = vmax.f32 %v260, 0.0
    %v267 = vmax.f32 %v262, 0.0
    %v268 = vld [vmem:[#allocation5] sm:$0x3]
    %v270 = vlaneseq
    %v271 = vshrl.u32 %v270, 7
    %v272 = vsub.s32 0, %v271
    %v273 = vrot.slane %v268, %v272
    %v274 = vlaneseq
    %v275 = vshrl.u32 %v274, 7
    %v276 = vsub.s32 1, %v275
    %v277 = vrot.slane %v268, %v276
    %v280 = vmul.f32 %v266, %v273
    %v281 = vmul.f32 %v267, %v277
    %v282 = vld [vmem:[#allocation7] sm:$0x3]
    %v284 = vlaneseq
    %v285 = vshrl.u32 %v284, 7
    %v286 = vsub.s32 0, %v285
    %v287 = vrot.slane %v282, %v286
    %v288 = vlaneseq
    %v289 = vshrl.u32 %v288, 7
    %v290 = vsub.s32 1, %v289
    %v291 = vrot.slane %v282, %v290
    %v294 = vadd.f32 %v280, %v287
    %v295 = vadd.f32 %v281, %v291
    %v296 = vpack.c.bf16 %v294, %v294
    %v297 = vpack.c.bf16 %v295, %v295
    %v298 = vld [vmem:[#allocation8] sm:$0xff]
    %v299 = vld [vmem:[#allocation8 + $0x8] sm:$0xff]
    %v300 = vld [vmem:[#allocation8 + $0x10] sm:$0xff]
    %v301 = vld [vmem:[#allocation8 + $0x18] sm:$0xff]
    %v302 = vld [vmem:[#allocation8 + $0x20] sm:$0xff]
    %v303 = vld [vmem:[#allocation8 + $0x28] sm:$0xff]
    %v304 = vld [vmem:[#allocation8 + $0x30] sm:$0xff]
    %v305 = vld [vmem:[#allocation8 + $0x38] sm:$0xff]
    %v306 = vld [vmem:[#allocation8 + $0x40] sm:$0xff]
    %v307 = vld [vmem:[#allocation8 + $0x48] sm:$0xff]
    %v308 = vld [vmem:[#allocation8 + $0x50] sm:$0xff]
    %v309 = vld [vmem:[#allocation8 + $0x58] sm:$0xff]
    %v310 = vld [vmem:[#allocation8 + $0x60] sm:$0xff]
    %v311 = vld [vmem:[#allocation8 + $0x68] sm:$0xff]
    %v312 = vld [vmem:[#allocation8 + $0x70] sm:$0xff]
    %v313 = vld [vmem:[#allocation8 + $0x78] sm:$0xff]
    %v314 = vld [vmem:[#allocation8 + $0x80] sm:$0xff]
    %v315 = vld [vmem:[#allocation8 + $0x88] sm:$0xff]
    %v316 = vld [vmem:[#allocation8 + $0x90] sm:$0xff]
    %v317 = vld [vmem:[#allocation8 + $0x98] sm:$0xff]
    %v318 = vld [vmem:[#allocation8 + $0xa0] sm:$0xff]
    %v319 = vld [vmem:[#allocation8 + $0xa8] sm:$0xff]
    %v320 = vld [vmem:[#allocation8 + $0xb0] sm:$0xff]
    %v321 = vld [vmem:[#allocation8 + $0xb8] sm:$0xff]
    %v322 = vld [vmem:[#allocation8 + $0xc0] sm:$0xff]
    %v323 = vld [vmem:[#allocation8 + $0xc8] sm:$0xff]
    %v324 = vld [vmem:[#allocation8 + $0xd0] sm:$0xff]
    %v325 = vld [vmem:[#allocation8 + $0xd8] sm:$0xff]
    %v326 = vld [vmem:[#allocation8 + $0xe0] sm:$0xff]
    %v327 = vld [vmem:[#allocation8 + $0xe8] sm:$0xff]
    %v328 = vld [vmem:[#allocation8 + $0xf0] sm:$0xff]
    %v329 = vld [vmem:[#allocation8 + $0xf8] sm:$0xff]
    %v330 = vld [vmem:[#allocation10] sm:$0x3]
    %v332 = vlaneseq
    %v333 = vshrl.u32 %v332, 7
    %v334 = vsub.s32 0, %v333
    %v335 = vrot.slane %v330, %v334
    %v336 = vlaneseq
    %v337 = vshrl.u32 %v336, 7
    %v338 = vsub.s32 1, %v337
    %v339 = vrot.slane %v330, %v338
    %v374 = vunpack.c.l.b16 %v298
    %v375 = vunpack.c.h.b16 %v298
    %v376 = vunpack.c.l.b16 %v299
    %v377 = vunpack.c.h.b16 %v299
    %v378 = vunpack.c.l.b16 %v300
    %v379 = vunpack.c.h.b16 %v300
    %v380 = vunpack.c.l.b16 %v301
    %v381 = vunpack.c.h.b16 %v301
    %v382 = vunpack.c.l.b16 %v302
    %v383 = vunpack.c.h.b16 %v302
    %v384 = vunpack.c.l.b16 %v303
    %v385 = vunpack.c.h.b16 %v303
    %v386 = vunpack.c.l.b16 %v304
    %v387 = vunpack.c.h.b16 %v304
    %v388 = vunpack.c.l.b16 %v305
    %v389 = vunpack.c.h.b16 %v305
    %v390 = vunpack.c.l.b16 %v306
    %v391 = vunpack.c.h.b16 %v306
    %v392 = vunpack.c.l.b16 %v307
    %v393 = vunpack.c.h.b16 %v307
    %v394 = vunpack.c.l.b16 %v308
    %v395 = vunpack.c.h.b16 %v308
    %v396 = vunpack.c.l.b16 %v309
    %v397 = vunpack.c.h.b16 %v309
    %v398 = vunpack.c.l.b16 %v310
    %v399 = vunpack.c.h.b16 %v310
    %v400 = vunpack.c.l.b16 %v311
    %v401 = vunpack.c.h.b16 %v311
    %v402 = vunpack.c.l.b16 %v312
    %v403 = vunpack.c.h.b16 %v312
    %v404 = vunpack.c.l.b16 %v313
    %v405 = vunpack.c.h.b16 %v313
    %v406 = vunpack.c.l.b16 %v314
    %v407 = vunpack.c.h.b16 %v314
    %v408 = vunpack.c.l.b16 %v315
    %v409 = vunpack.c.h.b16 %v315
    %v410 = vunpack.c.l.b16 %v316
    %v411 = vunpack.c.h.b16 %v316
    %v412 = vunpack.c.l.b16 %v317
    %v413 = vunpack.c.h.b16 %v317
    %v414 = vunpack.c.l.b16 %v318
    %v415 = vunpack.c.h.b16 %v318
    %v416 = vunpack.c.l.b16 %v319
    %v417 = vunpack.c.h.b16 %v319
    %v418 = vunpack.c.l.b16 %v320
    %v419 = vunpack.c.h.b16 %v320
    %v420 = vunpack.c.l.b16 %v321
    %v421 = vunpack.c.h.b16 %v321
    %v422 = vunpack.c.l.b16 %v322
    %v423 = vunpack.c.h.b16 %v322
    %v424 = vunpack.c.l.b16 %v323
    %v425 = vunpack.c.h.b16 %v323
    %v426 = vunpack.c.l.b16 %v324
    %v427 = vunpack.c.h.b16 %v324
    %v428 = vunpack.c.l.b16 %v325
    %v429 = vunpack.c.h.b16 %v325
    %v430 = vunpack.c.l.b16 %v326
    %v431 = vunpack.c.h.b16 %v326
    %v432 = vunpack.c.l.b16 %v327
    %v433 = vunpack.c.h.b16 %v327
    %v434 = vunpack.c.l.b16 %v328
    %v435 = vunpack.c.h.b16 %v328
    %v436 = vunpack.c.l.b16 %v329
    %v437 = vunpack.c.h.b16 %v329
    %v438 = vpack.c.b16 %v376, %v374
    %v439 = vpack.c.b16 %v377, %v375
    %v440 = vpack.c.b16 %v380, %v378
    %v441 = vpack.c.b16 %v381, %v379
    %v442 = vpack.c.b16 %v384, %v382
    %v443 = vpack.c.b16 %v385, %v383
    %v444 = vpack.c.b16 %v388, %v386
    %v445 = vpack.c.b16 %v389, %v387
    %v446 = vpack.c.b16 %v392, %v390
    %v447 = vpack.c.b16 %v393, %v391
    %v448 = vpack.c.b16 %v396, %v394
    %v449 = vpack.c.b16 %v397, %v395
    %v450 = vpack.c.b16 %v400, %v398
    %v451 = vpack.c.b16 %v401, %v399
    %v452 = vpack.c.b16 %v404, %v402
    %v453 = vpack.c.b16 %v405, %v403
    %v454 = vpack.c.b16 %v408, %v406
    %v455 = vpack.c.b16 %v409, %v407
    %v456 = vpack.c.b16 %v412, %v410
    %v457 = vpack.c.b16 %v413, %v411
    %v458 = vpack.c.b16 %v416, %v414
    %v459 = vpack.c.b16 %v417, %v415
    %v460 = vpack.c.b16 %v420, %v418
    %v461 = vpack.c.b16 %v421, %v419
    %v462 = vpack.c.b16 %v424, %v422
    %v463 = vpack.c.b16 %v425, %v423
    %v464 = vpack.c.b16 %v428, %v426
    %v465 = vpack.c.b16 %v429, %v427
    %v466 = vpack.c.b16 %v432, %v430
    %v467 = vpack.c.b16 %v433, %v431
    %v468 = vpack.c.b16 %v436, %v434
    %v469 = vpack.c.b16 %v437, %v435
    %502 = vmatprep.subr.bf16.mxu0 %v439
    %503 = vmatpush1.bf16.msra.mxu0 %v438
    %504 = vmatprep.subr.bf16.mxu0 %v441
    %505 = vmatpush1.bf16.msra.mxu0 %v440
    %506 = vmatprep.subr.bf16.mxu0 %v443
    %507 = vmatpush1.bf16.msra.mxu0 %v442
    %508 = vmatprep.subr.bf16.mxu0 %v445
    %509 = vmatpush1.bf16.msra.mxu0 %v444
    %510 = vmatprep.subr.bf16.mxu0 %v447
    %511 = vmatpush1.bf16.msra.mxu0 %v446
    %512 = vmatprep.subr.bf16.mxu0 %v449
    %513 = vmatpush1.bf16.msra.mxu0 %v448
    %514 = vmatprep.subr.bf16.mxu0 %v451
    %515 = vmatpush1.bf16.msra.mxu0 %v450
    %516 = vmatprep.subr.bf16.mxu0 %v453
    %517 = vmatpush1.bf16.msra.mxu0 %v452
    %518 = vmatprep.subr.bf16.mxu0 %v455
    %519 = vmatpush1.bf16.msra.mxu0 %v454
    %520 = vmatprep.subr.bf16.mxu0 %v457
    %521 = vmatpush1.bf16.msra.mxu0 %v456
    %522 = vmatprep.subr.bf16.mxu0 %v459
    %523 = vmatpush1.bf16.msra.mxu0 %v458
    %524 = vmatprep.subr.bf16.mxu0 %v461
    %525 = vmatpush1.bf16.msra.mxu0 %v460
    %526 = vmatprep.subr.bf16.mxu0 %v463
    %527 = vmatpush1.bf16.msra.mxu0 %v462
    %528 = vmatprep.subr.bf16.mxu0 %v465
    %529 = vmatpush1.bf16.msra.mxu0 %v464
    %530 = vmatprep.subr.bf16.mxu0 %v467
    %531 = vmatpush1.bf16.msra.mxu0 %v466
    %532 = vmatprep.subr.bf16.mxu0 %v469
    %533 = vmatpush1.bf16.msra.mxu0 %v468
    %534 = vmatprep.mubr.bf16.mxu0 %v297
    %535 = vmatmul.mubr.bf16.gmra.mrb[0].mxu0 %v296
    %v536 = vpop.f32.mrb[0].mxu0
    %v537 = vadd.f32 %v335, %v536
    %v538 = vpop.f32.mrb[0].mxu0
    %v539 = vadd.f32 %v339, %v538
    %v540 = vpop.f32.mrb[0].mxu0
    %v541 = vpop.f32.mrb[0].mxu0
    %542 = vdwg.mxu0
    %v543 = vmax.f32 %v537, 0.0
    %v544 = vmax.f32 %v539, 0.0
    %v545 = vld [vmem:[#allocation11] sm:$0x3]
    %v547 = vlaneseq
    %v548 = vshrl.u32 %v547, 7
    %v549 = vsub.s32 0, %v548
    %v550 = vrot.slane %v545, %v549
    %v551 = vlaneseq
    %v552 = vshrl.u32 %v551, 7
    %v553 = vsub.s32 1, %v552
    %v554 = vrot.slane %v545, %v553
    %v557 = vmul.f32 %v543, %v550
    %v558 = vmul.f32 %v544, %v554
    %v559 = vld [vmem:[#allocation13] sm:$0x3]
    %v561 = vlaneseq
    %v562 = vshrl.u32 %v561, 7
    %v563 = vsub.s32 0, %v562
    %v564 = vrot.slane %v559, %v563
    %v565 = vlaneseq
    %v566 = vshrl.u32 %v565, 7
    %v567 = vsub.s32 1, %v566
    %v568 = vrot.slane %v559, %v567
    %v571 = vadd.f32 %v557, %v564
    %v572 = vadd.f32 %v558, %v568
    %v573 = vadd.f32 %v571, %v294
    %v574 = vadd.f32 %v572, %v295
    %v575 = vpack.c.bf16 %v573, %v573
    %v576 = vpack.c.bf16 %v574, %v574
    %v577 = vld [vmem:[#allocation14] sm:$0xf]
    %v578 = vld [vmem:[#allocation14 + $0x4] sm:$0xf]
    %v579 = vld [vmem:[#allocation14 + $0x8] sm:$0xf]
    %v580 = vld [vmem:[#allocation14 + $0xc] sm:$0xf]
    %v581 = vld [vmem:[#allocation14 + $0x10] sm:$0xf]
    %v582 = vld [vmem:[#allocation14 + $0x14] sm:$0xf]
    %v583 = vld [vmem:[#allocation14 + $0x18] sm:$0xf]
    %v584 = vld [vmem:[#allocation14 + $0x1c] sm:$0xf]
    %v585 = vld [vmem:[#allocation14 + $0x20] sm:$0xf]
    %v586 = vld [vmem:[#allocation14 + $0x24] sm:$0xf]
    %v587 = vld [vmem:[#allocation14 + $0x28] sm:$0xf]
    %v588 = vld [vmem:[#allocation14 + $0x2c] sm:$0xf]
    %v589 = vld [vmem:[#allocation14 + $0x30] sm:$0xf]
    %v590 = vld [vmem:[#allocation14 + $0x34] sm:$0xf]
    %v591 = vld [vmem:[#allocation14 + $0x38] sm:$0xf]
    %v592 = vld [vmem:[#allocation14 + $0x3c] sm:$0xf]
    %v593 = vld [vmem:[#allocation14 + $0x40] sm:$0xf]
    %v594 = vld [vmem:[#allocation14 + $0x44] sm:$0xf]
    %v595 = vld [vmem:[#allocation14 + $0x48] sm:$0xf]
    %v596 = vld [vmem:[#allocation14 + $0x4c] sm:$0xf]
    %v597 = vld [vmem:[#allocation14 + $0x50] sm:$0xf]
    %v598 = vld [vmem:[#allocation14 + $0x54] sm:$0xf]
    %v599 = vld [vmem:[#allocation14 + $0x58] sm:$0xf]
    %v600 = vld [vmem:[#allocation14 + $0x5c] sm:$0xf]
    %v601 = vld [vmem:[#allocation14 + $0x60] sm:$0xf]
    %v602 = vld [vmem:[#allocation14 + $0x64] sm:$0xf]
    %v603 = vld [vmem:[#allocation14 + $0x68] sm:$0xf]
    %v604 = vld [vmem:[#allocation14 + $0x6c] sm:$0xf]
    %v605 = vld [vmem:[#allocation14 + $0x70] sm:$0xf]
    %v606 = vld [vmem:[#allocation14 + $0x74] sm:$0xf]
    %v607 = vld [vmem:[#allocation14 + $0x78] sm:$0xf]
    %v608 = vld [vmem:[#allocation14 + $0x7c] sm:$0xf]
    %v609 = vld [vmem:[#allocation16] sm:$0x1]
    %v611 = vlaneseq
    %v612 = vshrl.u32 %v611, 7
    %v613 = vsub.s32 0, %v612
    %v614 = vrot.slane %v609, %v613
    %v648 = vunpack.c.l.b16 %v577
    %v649 = vunpack.c.l.b16 %v578
    %v650 = vunpack.c.l.b16 %v579
    %v651 = vunpack.c.l.b16 %v580
    %v652 = vunpack.c.l.b16 %v581
    %v653 = vunpack.c.l.b16 %v582
    %v654 = vunpack.c.l.b16 %v583
    %v655 = vunpack.c.l.b16 %v584
    %v656 = vunpack.c.l.b16 %v585
    %v657 = vunpack.c.l.b16 %v586
    %v658 = vunpack.c.l.b16 %v587
    %v659 = vunpack.c.l.b16 %v588
    %v660 = vunpack.c.l.b16 %v589
    %v661 = vunpack.c.l.b16 %v590
    %v662 = vunpack.c.l.b16 %v591
    %v663 = vunpack.c.l.b16 %v592
    %v664 = vunpack.c.l.b16 %v593
    %v665 = vunpack.c.l.b16 %v594
    %v666 = vunpack.c.l.b16 %v595
    %v667 = vunpack.c.l.b16 %v596
    %v668 = vunpack.c.l.b16 %v597
    %v669 = vunpack.c.l.b16 %v598
    %v670 = vunpack.c.l.b16 %v599
    %v671 = vunpack.c.l.b16 %v600
    %v672 = vunpack.c.l.b16 %v601
    %v673 = vunpack.c.l.b16 %v602
    %v674 = vunpack.c.l.b16 %v603
    %v675 = vunpack.c.l.b16 %v604
    %v676 = vunpack.c.l.b16 %v605
    %v677 = vunpack.c.l.b16 %v606
    %v678 = vunpack.c.l.b16 %v607
    %v679 = vunpack.c.l.b16 %v608
    %v680 = vpack.c.b16 %v649, %v648
    %v681 = vpack.c.b16 %v651, %v650
    %v682 = vpack.c.b16 %v653, %v652
    %v683 = vpack.c.b16 %v655, %v654
    %v684 = vpack.c.b16 %v657, %v656
    %v685 = vpack.c.b16 %v659, %v658
    %v686 = vpack.c.b16 %v661, %v660
    %v687 = vpack.c.b16 %v663, %v662
    %v688 = vpack.c.b16 %v665, %v664
    %v689 = vpack.c.b16 %v667, %v666
    %v690 = vpack.c.b16 %v669, %v668
    %v691 = vpack.c.b16 %v671, %v670
    %v692 = vpack.c.b16 %v673, %v672
    %v693 = vpack.c.b16 %v675, %v674
    %v694 = vpack.c.b16 %v677, %v676
    %v695 = vpack.c.b16 %v679, %v678
    %712 = vmatprep.subr.bf16.mxu0 0
    %713 = vmatpush1.bf16.msra.mxu0 %v680
    %714 = vmatprep.subr.bf16.mxu0 0
    %715 = vmatpush1.bf16.msra.mxu0 %v681
    %716 = vmatprep.subr.bf16.mxu0 0
    %717 = vmatpush1.bf16.msra.mxu0 %v682
    %718 = vmatprep.subr.bf16.mxu0 0
    %719 = vmatpush1.bf16.msra.mxu0 %v683
    %720 = vmatprep.subr.bf16.mxu0 0
    %721 = vmatpush1.bf16.msra.mxu0 %v684
    %722 = vmatprep.subr.bf16.mxu0 0
    %723 = vmatpush1.bf16.msra.mxu0 %v685
    %724 = vmatprep.subr.bf16.mxu0 0
    %725 = vmatpush1.bf16.msra.mxu0 %v686
    %726 = vmatprep.subr.bf16.mxu0 0
    %727 = vmatpush1.bf16.msra.mxu0 %v687
    %728 = vmatprep.subr.bf16.mxu0 0
    %729 = vmatpush1.bf16.msra.mxu0 %v688
    %730 = vmatprep.subr.bf16.mxu0 0
    %731 = vmatpush1.bf16.msra.mxu0 %v689
    %732 = vmatprep.subr.bf16.mxu0 0
    %733 = vmatpush1.bf16.msra.mxu0 %v690
    %734 = vmatprep.subr.bf16.mxu0 0
    %735 = vmatpush1.bf16.msra.mxu0 %v691
    %736 = vmatprep.subr.bf16.mxu0 0
    %737 = vmatpush1.bf16.msra.mxu0 %v692
    %738 = vmatprep.subr.bf16.mxu0 0
    %739 = vmatpush1.bf16.msra.mxu0 %v693
    %740 = vmatprep.subr.bf16.mxu0 0
    %741 = vmatpush1.bf16.msra.mxu0 %v694
    %742 = vmatprep.subr.bf16.mxu0 0
    %743 = vmatpush1.bf16.msra.mxu0 %v695
    %744 = vmatprep.mubr.bf16.mxu0 %v576
    %745 = vmatmul.mubr.bf16.gmra.mrb[0].mxu0 %v575
    %v746 = vpop.f32.mrb[0].mxu0
    %v747 = vadd.f32 %v614, %v746
    %v748 = vpop.f32.mrb[0].mxu0
    %v749 = vpop.f32.mrb[0].mxu0
    %v750 = vpop.f32.mrb[0].mxu0
    %751 = vdwg.mxu0
    %v752 = vmax.f32 %v747, 0.0
    %v753 = vpack.c.bf16 %v752, %v752
    %v754 = vld [vmem:[#allocation17] sm:$0xf]
    %v755 = vld [vmem:[#allocation17 + $0x4] sm:$0xf]
    %v756 = vld [vmem:[#allocation17 + $0x8] sm:$0xf]
    %v757 = vld [vmem:[#allocation17 + $0xc] sm:$0xf]
    %v758 = vld [vmem:[#allocation17 + $0x10] sm:$0xf]
    %v759 = vld [vmem:[#allocation17 + $0x14] sm:$0xf]
    %v760 = vld [vmem:[#allocation17 + $0x18] sm:$0xf]
    %v761 = vld [vmem:[#allocation17 + $0x1c] sm:$0xf]
    %v762 = vld [vmem:[#allocation17 + $0x20] sm:$0xf]
    %v763 = vld [vmem:[#allocation17 + $0x24] sm:$0xf]
    %v764 = vld [vmem:[#allocation17 + $0x28] sm:$0xf]
    %v765 = vld [vmem:[#allocation17 + $0x2c] sm:$0xf]
    %v766 = vld [vmem:[#allocation17 + $0x30] sm:$0xf]
    %v767 = vld [vmem:[#allocation17 + $0x34] sm:$0xf]
    %v768 = vld [vmem:[#allocation17 + $0x38] sm:$0xf]
    %v769 = vld [vmem:[#allocation17 + $0x3c] sm:$0xf]
    %v770 = vld [vmem:[#allocation19] sm:$0x1]
    %v772 = vlaneseq
    %v773 = vshrl.u32 %v772, 7
    %v774 = vsub.s32 0, %v773
    %v775 = vrot.slane %v770, %v774
    %v793 = vunpack.c.l.b16 %v754
    %v794 = vunpack.c.l.b16 %v755
    %v795 = vunpack.c.l.b16 %v756
    %v796 = vunpack.c.l.b16 %v757
    %v797 = vunpack.c.l.b16 %v758
    %v798 = vunpack.c.l.b16 %v759
    %v799 = vunpack.c.l.b16 %v760
    %v800 = vunpack.c.l.b16 %v761
    %v801 = vunpack.c.l.b16 %v762
    %v802 = vunpack.c.l.b16 %v763
    %v803 = vunpack.c.l.b16 %v764
    %v804 = vunpack.c.l.b16 %v765
    %v805 = vunpack.c.l.b16 %v766
    %v806 = vunpack.c.l.b16 %v767
    %v807 = vunpack.c.l.b16 %v768
    %v808 = vunpack.c.l.b16 %v769
    %v809 = vpack.c.b16 %v794, %v793
    %v810 = vpack.c.b16 %v796, %v795
    %v811 = vpack.c.b16 %v798, %v797
    %v812 = vpack.c.b16 %v800, %v799
    %v813 = vpack.c.b16 %v802, %v801
    %v814 = vpack.c.b16 %v804, %v803
    %v815 = vpack.c.b16 %v806, %v805
    %v816 = vpack.c.b16 %v808, %v807
    %825 = vmatprep.subr.bf16.mxu0 0
    %826 = vmatpush1.bf16.msra.mxu0 %v809
    %827 = vmatprep.subr.bf16.mxu0 0
    %828 = vmatpush1.bf16.msra.mxu0 %v810
    %829 = vmatprep.subr.bf16.mxu0 0
    %830 = vmatpush1.bf16.msra.mxu0 %v811
    %831 = vmatprep.subr.bf16.mxu0 0
    %832 = vmatpush1.bf16.msra.mxu0 %v812
    %833 = vmatprep.subr.bf16.mxu0 0
    %834 = vmatpush1.bf16.msra.mxu0 %v813
    %835 = vmatprep.subr.bf16.mxu0 0
    %836 = vmatpush1.bf16.msra.mxu0 %v814
    %837 = vmatprep.subr.bf16.mxu0 0
    %838 = vmatpush1.bf16.msra.mxu0 %v815
    %839 = vmatprep.subr.bf16.mxu0 0
    %840 = vmatpush1.bf16.msra.mxu0 %v816
    %841 = vmatprep.subr.bf16.mxu0 0
    %842 = vmatpush1.bf16.msra.mxu0 0
    %843 = vmatprep.subr.bf16.mxu0 0
    %844 = vmatpush1.bf16.msra.mxu0 0
    %845 = vmatprep.subr.bf16.mxu0 0
    %846 = vmatpush1.bf16.msra.mxu0 0
    %847 = vmatprep.subr.bf16.mxu0 0
    %848 = vmatpush1.bf16.msra.mxu0 0
    %849 = vmatprep.subr.bf16.mxu0 0
    %850 = vmatpush1.bf16.msra.mxu0 0
    %851 = vmatprep.subr.bf16.mxu0 0
    %852 = vmatpush1.bf16.msra.mxu0 0
    %853 = vmatprep.subr.bf16.mxu0 0
    %854 = vmatpush1.bf16.msra.mxu0 0
    %855 = vmatprep.subr.bf16.mxu0 0
    %856 = vmatpush1.bf16.msra.mxu0 0
    %857 = vmatprep.mubr.bf16.mxu0 0
    %858 = vmatmul.mubr.bf16.gmra.mrb[0].mxu0 %v753
    %v859 = vpop.f32.mrb[0].mxu0
    %v860 = vadd.f32 %v775, %v859
    %v861 = vpop.f32.mrb[0].mxu0
    %v862 = vpop.f32.mrb[0].mxu0
    %v863 = vpop.f32.mrb[0].mxu0
    %864 = vdwg.mxu0
    %vm865 = vcmask 1041408
    %v866 = vsel %vm865, %v860, -inf
    %867 = vmax.xlane.f32.xlu0 %v866
    %v868 = vpop.xlane.xlu0 %867
    %v869 = vsub.f32 %v860, %v868
    %v870 = vmul.f32 %v869, 1.442695
    %v871 = vpow.pop %v870
    %v872 = vsel %vm865, %v871, 0.0
    %873 = vadd.xlane.f32.xlu0 %v872
    %v874 = vpop.xlane.xlu0 %873
    %v875 = vrcp.pop %v874
    %v876 = vmul.f32 %v871, %v875
    %vm877 = vcmask 58368
    %878 = vst.msk [vmem:[#allocation20] sm:$0x3] %vm877, %v876
    // Predicated region
    $region98: #{policy_forward.1} parent=1 // pred_check
      _
    $region99: #{policy_forward.1} parent=1 // pred_check_branch
      %880 = sbr.rel (0) target = $region101
    $region100: #{policy_forward.1} parent=1 // pred_region
      %s882 = ssub.s32 32, 32
      %883 = vsyncadd [#allocation4], %s882
      %s885 = sshll.u32 [#allocation20], 4
      %s886 = int_to_ptr.vmem [resolvable:$true] %s885
      %888 = dma.vmem_to_hbm [thread:$0]  %s886, 32, %s13, [#allocation4]
    $region101: #{policy_forward.1} parent=1 // pred_fallthru
      _
    // Predicated region
    $region102: #{policy_forward.1} parent=1 // pred_check
      _
    $region103: #{policy_forward.1} parent=1 // pred_check_branch
      %890 = sbr.rel (0) target = $region105
    $region104: #{policy_forward.1} parent=1 // pred_region
      %891 = dma.done [#allocation4], 32
    $region105: #{policy_forward.1} parent=1 // pred_fallthru
      _
    %892 = vsyncpa [#allocation3], 1
    %893 = vsyncpa [#allocation6], 1
    %894 = vsyncpa [#allocation9], 1
    %895 = vsyncpa [#allocation12], 1
    %896 = vsyncpa [#allocation15], 1
    %897 = vsyncpa [#allocation18], 1
    %898 = vsyncpa [#allocation4], 1

</llo_original>
